<compile_context>
chip_gen: v5e
topology: v5e:2x2
jax: 0.10.0
libtpu: 0.0.40
codegen_flags: <defaults>
</compile_context>

<pallas_src>
import functools

import jax
import jax.numpy as jnp
from jax.experimental import pallas as pl
from jax.experimental.pallas import tpu as pltpu


def _segments_linear_kernel(x2_ref, w_ref, b_ref, o_ref, acc_ref, *,
                            num_segments, blocks_per_batch, hop, chunk_lens):
    """Hop-chunk K-decomposition of the per-segment Linear.

    x2_ref : (batch * blocks_per_batch, hop)            f32, hop-blocked view of x
             row (b * blocks_per_batch + t) == x[b, t*hop : (t+1)*hop]
    w_ref  : (segment_length, num_classes)              f32
    b_ref  : (1, num_classes)                           f32
    o_ref  : (batch * num_segments, num_classes)        out dtype, batch-major rows
    acc_ref: (batch*blocks_per_batch - n_chunks + 1, C) f32 scratch accumulator

    acc[r] = sum_j x2[r + j] @ W[j*hop : j*hop + len_j]   (f32 accumulate)
    out[b*S + s] = acc[b*blocks_per_batch + s] + bias      (only rows s < S read)
    """
    S = num_segments
    nblk = blocks_per_batch
    batch = x2_ref.shape[0] // nblk
    m_rows = acc_ref.shape[0]

    # Tiny static loop over K chunks (segment_length/hop terms).  Casts to bf16
    # happen on the VPU right before the MXU; accumulation is f32.
    for j, clen in enumerate(chunk_lens):
        lhs = x2_ref[j:j + m_rows, :clen].astype(jnp.bfloat16)           # (M, clen)
        rhs = w_ref[j * hop:j * hop + clen, :].astype(jnp.bfloat16)      # (clen, C)
        part = jnp.dot(lhs, rhs, preferred_element_type=jnp.float32)     # (M, C)
        if j == 0:
            acc_ref[...] = part
        else:
            acc_ref[...] += part

    bias = b_ref[...]                                                    # (1, C) f32
    # Batch-major output rows (row = b*S + s): wrapper reshape to (B,S,C) is free.
    for b in range(batch):                       # B slab writes of (S, C) each
        o_ref[b * S:(b + 1) * S, :] = (
            acc_ref[b * nblk:b * nblk + S, :] + bias).astype(o_ref.dtype)


def cut_input_into_segments_forward(x, weight, bias, *, max_input_length,
                                    segment_length, hop_size):
    """JAX/Pallas equivalent of CutInputIntoSegmentsWrapper.forward."""
    batch, input_length = x.shape
    num_classes = weight.shape[1]
    out_dtype = x.dtype

    if input_length <= max_input_length:
        # PyTorch: return self.model(x).unsqueeze(1)
        # TODO(synk): the real wrapped model accepts any length <= max_input_length;
        # the synthetic Linear inner model requires input_length == segment_length.
        assert input_length == segment_length, (
            "synthetic inner model only supports input_length == segment_length "
            "on the short path")
        starts = tuple([0])
    else:
        # Matches torch range() semantics: trailing samples that don't fill a
        # full segment are dropped.
        starts = tuple(range(0, input_length - segment_length + 1, hop_size))
    num_segments = len(starts)

    # K decomposed at hop granularity (last chunk may be partial).
    n_full, rem = divmod(segment_length, hop_size)
    chunk_lens = (hop_size,) * n_full + ((rem,) if rem else ())
    n_chunks = len(chunk_lens)
    n_used = num_segments + n_chunks - 1          # hop-blocks of x actually read

    # hop-blocked 2-D view of x: row (b*nblk + t) = x[b, t*hop : (t+1)*hop].
    if input_length % hop_size == 0 and input_length // hop_size >= n_used:
        nblk = input_length // hop_size
        x2 = x.reshape(batch * nblk, hop_size)    # free: contiguous reshape
    else:
        # Rare path (trailing samples / partial chunk): one slice+pad copy of x.
        nblk = n_used
        xt = x[:, :min(input_length, nblk * hop_size)]
        pad_cols = nblk * hop_size - xt.shape[1]
        if pad_cols:
            xt = jnp.pad(xt, ((0, 0), (0, pad_cols)))
        x2 = xt.reshape(batch * nblk, hop_size)

    m_rows = batch * nblk - n_chunks + 1          # rows processed per K chunk
    bias_2d = bias.reshape(1, num_classes).astype(jnp.float32)

    flops = 2 * m_rows * segment_length * num_classes
    bytes_accessed = (x2.size * x2.dtype.itemsize
                      + weight.size * weight.dtype.itemsize
                      + bias_2d.size * 4
                      + batch * num_segments * num_classes
                      * jnp.dtype(out_dtype).itemsize)

    kernel = functools.partial(
        _segments_linear_kernel,
        num_segments=num_segments, blocks_per_batch=nblk,
        hop=hop_size, chunk_lens=chunk_lens)

    out = pl.pallas_call(
        kernel,
        out_shape=jax.ShapeDtypeStruct((batch * num_segments, num_classes),
                                       out_dtype),
        # Single invocation (no grid): all operands resident in VMEM at once.
        # TODO(synk): at real PaSST scale, grid over rows with weight resident
        # and explicit vmem_limit_bytes (v7x has only 64 MiB VMEM).
        in_specs=[
            pl.BlockSpec(memory_space=pltpu.MemorySpace.VMEM),   # x2     (f32)
            pl.BlockSpec(memory_space=pltpu.MemorySpace.VMEM),   # weight (f32)
            pl.BlockSpec(memory_space=pltpu.MemorySpace.VMEM),   # bias   (f32)
        ],
        out_specs=pl.BlockSpec(memory_space=pltpu.MemorySpace.VMEM),
        scratch_shapes=[pltpu.VMEM((m_rows, num_classes), jnp.float32)],
        cost_estimate=pl.CostEstimate(flops=flops, transcendentals=0,
                                      bytes_accessed=bytes_accessed),
    )(x2, weight, bias_2d)

    # (B*S, C) -> (B, S, C): rows are batch-major, so this is a pure reshape.
    return out.reshape(batch, num_segments, num_classes)


def _reference(x, weight, bias, *, max_input_length, segment_length, hop_size):
    """Pure-JAX reference mirroring the kernel numerics (bf16 inputs, f32 acc)."""
    batch, input_length = x.shape
    w_lo = weight.astype(jnp.bfloat16)

    def linear(v):
        return (jnp.dot(v.astype(jnp.bfloat16), w_lo,
                        preferred_element_type=jnp.float32)
                + bias.astype(jnp.float32))

    if input_length <= max_input_length:
        return linear(x)[:, None, :].astype(x.dtype)
    idx = list(range(0, input_length - segment_length + 1, hop_size))
    segs = jnp.stack([x[:, i:i + segment_length] for i in idx], axis=1)  # (B,S,L)
    out = linear(segs.reshape(-1, segment_length))
    return out.reshape(batch, len(idx), -1).astype(x.dtype)


if __name__ == "__main__":
    # Module hyper-params (small but TPU lane-friendly).
    max_input_length = 256
    segment_length = 256
    hop_size = 128
    num_classes = 128

    batch = 2
    input_length = 512   # > max_input_length -> segmentation path, S = 3

    key = jax.random.PRNGKey(0)
    kx, kw, kb = jax.random.split(key, 3)
    x = jax.random.normal(kx, (batch, input_length), dtype=jnp.float32)
    # Deterministic synthetic inner model: Linear(segment_length -> num_classes)
    weight = (jax.random.normal(kw, (segment_length, num_classes),
                                dtype=jnp.float32)
              * (1.0 / jnp.sqrt(segment_length)))
    bias = jax.random.normal(kb, (num_classes,), dtype=jnp.float32) * 0.01

    kwargs = dict(max_input_length=max_input_length,
                  segment_length=segment_length, hop_size=hop_size)

    # Long path: segmentation into S = 3 overlapping segments.
    out = jax.block_until_ready(
        cut_input_into_segments_forward(x, weight, bias, **kwargs))
    ref = _reference(x, weight, bias, **kwargs)
    assert out.shape == (batch, 3, num_classes), out.shape
    assert jnp.allclose(out, ref, atol=1e-3, rtol=1e-3), float(
        jnp.max(jnp.abs(out - ref)))

    # Short path: input_length <= max_input_length -> model(x).unsqueeze(1).
    x_short = x[:, :segment_length]
    out_s = jax.block_until_ready(
        cut_input_into_segments_forward(x_short, weight, bias, **kwargs))
    ref_s = _reference(x_short, weight, bias, **kwargs)
    assert out_s.shape == (batch, 1, num_classes), out_s.shape
    assert jnp.allclose(out_s, ref_s, atol=1e-3, rtol=1e-3), float(
        jnp.max(jnp.abs(out_s - ref_s)))

    print("KERNEL_OK")
</pallas_src>

<mosaic_0001>
module attributes {stable_mosaic.version = 11 : i64} {
  func.func @_segments_linear_kernel(%arg0: memref<8x128xf32, #tpu.memory_space<vmem>>, %arg1: memref<256x128xf32, #tpu.memory_space<vmem>>, %arg2: memref<1x128xf32, #tpu.memory_space<vmem>>, %arg3: memref<6x128xf32, #tpu.memory_space<vmem>>, %arg4: memref<7x128xf32, #tpu.memory_space<vmem>>) attributes {dimension_semantics = [], scalar_prefetch = 0 : i64, scratch_operands = 1 : i64, tpu.core_type = #tpu.core_type<tc>} {
    %c0 = arith.constant 0 : index
    %c0_0 = arith.constant 0 : index
    %0 = vector.load %arg0[%c0, %c0_0] : memref<8x128xf32, #tpu.memory_space<vmem>>, vector<7x128xf32>
    %1 = arith.truncf %0 : vector<7x128xf32> to vector<7x128xbf16>
    %c0_1 = arith.constant 0 : index
    %c0_2 = arith.constant 0 : index
    %2 = vector.load %arg1[%c0_1, %c0_2] : memref<256x128xf32, #tpu.memory_space<vmem>>, vector<128x128xf32>
    %3 = arith.truncf %2 : vector<128x128xf32> to vector<128x128xbf16>
    %cst = arith.constant dense<0.000000e+00> : vector<7x128xf32>
    %4 = tpu.matmul %1, %3, %cst {dimension_numbers = #tpu.dot_dimension_numbers<[1], [0], [0], [1], [0, 0, 1, 1], [], []>} : vector<7x128xbf16>, vector<128x128xbf16>, vector<7x128xf32> -> vector<7x128xf32>
    %c0_3 = arith.constant 0 : index
    %c0_4 = arith.constant 0 : index
    %5 = vector.load %arg4[%c0_3, %c0_4] : memref<7x128xf32, #tpu.memory_space<vmem>>, vector<7x128xf32>
    tpu.vector_store %arg4[%c0_3, %c0_4], %4 {strides = array<i32>} : memref<7x128xf32, #tpu.memory_space<vmem>>, vector<7x128xf32>,
    %c1 = arith.constant 1 : index
    %c0_5 = arith.constant 0 : index
    %6 = vector.load %arg0[%c1, %c0_5] : memref<8x128xf32, #tpu.memory_space<vmem>>, vector<7x128xf32>
    %7 = arith.truncf %6 : vector<7x128xf32> to vector<7x128xbf16>
    %c128 = arith.constant 128 : index
    %c0_6 = arith.constant 0 : index
    %8 = vector.load %arg1[%c128, %c0_6] : memref<256x128xf32, #tpu.memory_space<vmem>>, vector<128x128xf32>
    %9 = arith.truncf %8 : vector<128x128xf32> to vector<128x128xbf16>
    %cst_7 = arith.constant dense<0.000000e+00> : vector<7x128xf32>
    %10 = tpu.matmul %7, %9, %cst_7 {dimension_numbers = #tpu.dot_dimension_numbers<[1], [0], [0], [1], [0, 0, 1, 1], [], []>} : vector<7x128xbf16>, vector<128x128xbf16>, vector<7x128xf32> -> vector<7x128xf32>
    %c0_8 = arith.constant 0 : index
    %c0_9 = arith.constant 0 : index
    %11 = vector.load %arg4[%c0_8, %c0_9] : memref<7x128xf32, #tpu.memory_space<vmem>>, vector<7x128xf32>
    %12 = arith.addf %11, %10 : vector<7x128xf32>
    %c0_10 = arith.constant 0 : index
    %c0_11 = arith.constant 0 : index
    %13 = vector.load %arg4[%c0_10, %c0_11] : memref<7x128xf32, #tpu.memory_space<vmem>>, vector<7x128xf32>
    tpu.vector_store %arg4[%c0_10, %c0_11], %12 {strides = array<i32>} : memref<7x128xf32, #tpu.memory_space<vmem>>, vector<7x128xf32>,
    %c0_12 = arith.constant 0 : index
    %c0_13 = arith.constant 0 : index
    %14 = vector.load %arg2[%c0_12, %c0_13] : memref<1x128xf32, #tpu.memory_space<vmem>>, vector<1x128xf32>
    %c0_14 = arith.constant 0 : index
    %c0_15 = arith.constant 0 : index
    %15 = vector.load %arg4[%c0_14, %c0_15] : memref<7x128xf32, #tpu.memory_space<vmem>>, vector<3x128xf32>
    %16 = vector.broadcast %14 : vector<1x128xf32> to vector<3x128xf32>
    %17 = arith.addf %15, %16 : vector<3x128xf32>
    %c0_16 = arith.constant 0 : index
    %c0_17 = arith.constant 0 : index
    %18 = vector.load %arg3[%c0_16, %c0_17] : memref<6x128xf32, #tpu.memory_space<vmem>>, vector<3x128xf32>
    tpu.vector_store %arg3[%c0_16, %c0_17], %17 {strides = array<i32>} : memref<6x128xf32, #tpu.memory_space<vmem>>, vector<3x128xf32>,
    %c4 = arith.constant 4 : index
    %c0_18 = arith.constant 0 : index
    %19 = vector.load %arg4[%c4, %c0_18] : memref<7x128xf32, #tpu.memory_space<vmem>>, vector<3x128xf32>
    %20 = vector.broadcast %14 : vector<1x128xf32> to vector<3x128xf32>
    %21 = arith.addf %19, %20 : vector<3x128xf32>
    %c3 = arith.constant 3 : index
    %c0_19 = arith.constant 0 : index
    %22 = vector.load %arg3[%c3, %c0_19] : memref<6x128xf32, #tpu.memory_space<vmem>>, vector<3x128xf32>
    tpu.vector_store %arg3[%c3, %c0_19], %21 {strides = array<i32>} : memref<6x128xf32, #tpu.memory_space<vmem>>, vector<3x128xf32>,
    return
  }
}

</mosaic_0001>

<llo_original>
// kernel: tpu_custom_call.1
$region0: #{tpu_custom_call.1}
  #allocation0 [shape = 'u32[]', space=smem, size = 0x4, offset = 0x4, fixed_abs, tag = 'smem constant byte address 0x4 - core index']
  #allocation1 [shape = 'u32[72,128]{1,0:T(1,128)}', space=vmem, size = 0x9000, scoped, tag = 'internal scratch']
  #allocation2 [shape = 'f32[7,128]{1,0:T(8,128)}', space=vmem, size = 0x1000, scoped, tag = 'scratch operand']
  %s0 = inlined_call_operand.hbm [shape: f32[8,128], index: 0, kind: input, shape index: {}]
  %s1 = inlined_call_operand.hbm [shape: f32[256,128], index: 1, kind: input, shape index: {}]
  %s2 = inlined_call_operand.vmem [shape: f32[1,128], index: 2, kind: input, shape index: {}]
  %s3 = inlined_call_operand.hbm [shape: f32[6,128], index: 3, kind: output, shape index: {}]
  %s4 = sld [smem:[#allocation0]]
  $region30: #{tpu_custom_call.1} parent=0
    _
  %s6 = ssub.s32 1, %s4
  %s7 = scalar_select 0, %s6, %s4
  $region1: #{tpu_custom_call.1} parent=0
    #allocation3 [shape = 'u8[4096]{0}', space=vmem, size = 0x1000, scoped, tag = 'input window, operand 0, single buffered']
    #allocation4 [shape = 's32[1]{0}', space=sflag, size = 0x4, scoped, tag = 'scoped memory for tpu_custom_call.1']
    #allocation5 [shape = 's32[1]{0}', space=sflag, size = 0x4, scoped, tag = 'scoped memory for tpu_custom_call.1']
    #allocation6 [shape = 'u8[131072]{0}', space=vmem, size = 0x20000, scoped, tag = 'input window, operand 1, single buffered']
    #allocation7 [shape = 's32[1]{0}', space=sflag, size = 0x4, scoped, tag = 'scoped memory for tpu_custom_call.1']
    #allocation8 [shape = 'u8[4096]{0}', space=vmem, size = 0x1000, scoped, tag = 'output window, operand 0, single buffered']
    %8 = vsyncpa [#allocation4], 0
    %9 = vsyncpa [#allocation7], 0
    %10 = vsyncpa [#allocation5], 0
    // Predicated region
    $region2: #{tpu_custom_call.1} parent=1 // pred_check
      _
    $region3: #{tpu_custom_call.1} parent=1 // pred_check_branch
      %12 = sbr.rel (0) target = $region5
    $region4: #{tpu_custom_call.1} parent=1 // pred_region
      %14 = vsyncadd [#allocation4], 0
      %s16 = sshll.u32 %s0, 4
      %s17 = int_to_ptr.hbm [resolvable:$true] %s16
      %s18 = sshll.u32 [#allocation3], 4
      %s19 = int_to_ptr.vmem [resolvable:$true] %s18
      %21 = dma.hbm_to_vmem [thread:$0]  %s17, 128, %s19, [#allocation4]
    $region5: #{tpu_custom_call.1} parent=1 // pred_fallthru
      _
    // Predicated region
    $region6: #{tpu_custom_call.1} parent=1 // pred_check
      _
    $region7: #{tpu_custom_call.1} parent=1 // pred_check_branch
      %23 = sbr.rel (0) target = $region9
    $region8: #{tpu_custom_call.1} parent=1 // pred_region
      %25 = vsyncadd [#allocation7], 0
      %s26 = sshll.u32 %s1, 4
      %s27 = int_to_ptr.hbm [resolvable:$true] %s26
      %s28 = sshll.u32 [#allocation6], 4
      %s29 = int_to_ptr.vmem [resolvable:$true] %s28
      %34 = dma.hbm_to_vmem [thread:$0]  %s27, 4096, %s29, [#allocation7], 128, 128, 8
    $region9: #{tpu_custom_call.1} parent=1 // pred_fallthru
      _
    // Predicated region
    $region10: #{tpu_custom_call.1} parent=1 // pred_check
      _
    $region11: #{tpu_custom_call.1} parent=1 // pred_check_branch
      %36 = sbr.rel (0) target = $region13
    $region12: #{tpu_custom_call.1} parent=1 // pred_region
      _
    $region13: #{tpu_custom_call.1} parent=1 // pred_fallthru
      _
    // Predicated region
    $region14: #{tpu_custom_call.1} parent=1 // pred_check
      _
    $region15: #{tpu_custom_call.1} parent=1 // pred_check_branch
      %38 = sbr.rel (0) target = $region17
    $region16: #{tpu_custom_call.1} parent=1 // pred_region
      %40 = dma.done [#allocation4], 128
    $region17: #{tpu_custom_call.1} parent=1 // pred_fallthru
      _
    // Predicated region
    $region18: #{tpu_custom_call.1} parent=1 // pred_check
      _
    $region19: #{tpu_custom_call.1} parent=1 // pred_check_branch
      %42 = sbr.rel (0) target = $region21
    $region20: #{tpu_custom_call.1} parent=1 // pred_region
      %44 = dma.done [#allocation7], 4096
    $region21: #{tpu_custom_call.1} parent=1 // pred_fallthru
      _
    %v45 = vld [vmem:[#allocation3] sm:$0x7f]
    %v46 = vpack.c.bf16 %v45, %v45
    %v47 = vld [vmem:[#allocation6] sm:$0xff]
    %v48 = vld [vmem:[#allocation6 + $0x8] sm:$0xff]
    %v49 = vld [vmem:[#allocation6 + $0x10] sm:$0xff]
    %v50 = vld [vmem:[#allocation6 + $0x18] sm:$0xff]
    %v51 = vld [vmem:[#allocation6 + $0x20] sm:$0xff]
    %v52 = vld [vmem:[#allocation6 + $0x28] sm:$0xff]
    %v53 = vld [vmem:[#allocation6 + $0x30] sm:$0xff]
    %v54 = vld [vmem:[#allocation6 + $0x38] sm:$0xff]
    %v55 = vld [vmem:[#allocation6 + $0x40] sm:$0xff]
    %v56 = vld [vmem:[#allocation6 + $0x48] sm:$0xff]
    %v57 = vld [vmem:[#allocation6 + $0x50] sm:$0xff]
    %v58 = vld [vmem:[#allocation6 + $0x58] sm:$0xff]
    %v59 = vld [vmem:[#allocation6 + $0x60] sm:$0xff]
    %v60 = vld [vmem:[#allocation6 + $0x68] sm:$0xff]
    %v61 = vld [vmem:[#allocation6 + $0x70] sm:$0xff]
    %v62 = vld [vmem:[#allocation6 + $0x78] sm:$0xff]
    %v63 = vpack.c.bf16 %v48, %v47
    %v64 = vpack.c.bf16 %v50, %v49
    %v65 = vpack.c.bf16 %v52, %v51
    %v66 = vpack.c.bf16 %v54, %v53
    %v67 = vpack.c.bf16 %v56, %v55
    %v68 = vpack.c.bf16 %v58, %v57
    %v69 = vpack.c.bf16 %v60, %v59
    %v70 = vpack.c.bf16 %v62, %v61
    %71 = vmatpush.bf16.msra.mxu0 %v70
    %72 = vmatpush.bf16.msra.mxu0 %v69
    %73 = vmatpush.bf16.msra.mxu0 %v68
    %74 = vmatpush.bf16.msra.mxu0 %v67
    %75 = vmatpush.bf16.msra.mxu0 %v66
    %76 = vmatpush.bf16.msra.mxu0 %v65
    %77 = vmatpush.bf16.msra.mxu0 %v64
    %78 = vmatpush.bf16.msra.mxu0 %v63
    %79 = vmatmul.bf16.gmra.mxu0 %v46
    %v80 = vpop.f32.mrf.mxu0
    %v81 = vadd.f32 0.0, %v80
    %v82 = vpop.f32.mrf.mxu0
    %83 = vdwg.mxu0
    %84 = vst [vmem:[#allocation2] sm:$0x7f] %v81
    %v85 = vld [vmem:[#allocation3 + $0x1] sm:$0x7f]
    %v86 = vpack.c.bf16 %v85, %v85
    %v87 = vld [vmem:[#allocation6 + $0x80] sm:$0xff]
    %v88 = vld [vmem:[#allocation6 + $0x88] sm:$0xff]
    %v89 = vld [vmem:[#allocation6 + $0x90] sm:$0xff]
    %v90 = vld [vmem:[#allocation6 + $0x98] sm:$0xff]
    %v91 = vld [vmem:[#allocation6 + $0xa0] sm:$0xff]
    %v92 = vld [vmem:[#allocation6 + $0xa8] sm:$0xff]
    %v93 = vld [vmem:[#allocation6 + $0xb0] sm:$0xff]
    %v94 = vld [vmem:[#allocation6 + $0xb8] sm:$0xff]
    %v95 = vld [vmem:[#allocation6 + $0xc0] sm:$0xff]
    %v96 = vld [vmem:[#allocation6 + $0xc8] sm:$0xff]
    %v97 = vld [vmem:[#allocation6 + $0xd0] sm:$0xff]
    %v98 = vld [vmem:[#allocation6 + $0xd8] sm:$0xff]
    %v99 = vld [vmem:[#allocation6 + $0xe0] sm:$0xff]
    %v100 = vld [vmem:[#allocation6 + $0xe8] sm:$0xff]
    %v101 = vld [vmem:[#allocation6 + $0xf0] sm:$0xff]
    %v102 = vld [vmem:[#allocation6 + $0xf8] sm:$0xff]
    %v103 = vpack.c.bf16 %v88, %v87
    %v104 = vpack.c.bf16 %v90, %v89
    %v105 = vpack.c.bf16 %v92, %v91
    %v106 = vpack.c.bf16 %v94, %v93
    %v107 = vpack.c.bf16 %v96, %v95
    %v108 = vpack.c.bf16 %v98, %v97
    %v109 = vpack.c.bf16 %v100, %v99
    %v110 = vpack.c.bf16 %v102, %v101
    %111 = vmatpush.bf16.msra.mxu0 %v110
    %112 = vmatpush.bf16.msra.mxu0 %v109
    %113 = vmatpush.bf16.msra.mxu0 %v108
    %114 = vmatpush.bf16.msra.mxu0 %v107
    %115 = vmatpush.bf16.msra.mxu0 %v106
    %116 = vmatpush.bf16.msra.mxu0 %v105
    %117 = vmatpush.bf16.msra.mxu0 %v104
    %118 = vmatpush.bf16.msra.mxu0 %v103
    %119 = vmatmul.bf16.gmra.mxu0 %v86
    %v120 = vpop.f32.mrf.mxu0
    %v121 = vadd.f32 0.0, %v120
    %v122 = vpop.f32.mrf.mxu0
    %123 = vdwg.mxu0
    %v124 = vld [vmem:[#allocation2] sm:$0x7f]
    %v125 = vadd.f32 %v124, %v121
    %126 = vst [vmem:[#allocation2] sm:$0x7f] %v125
    %v127 = vld [vmem:[%s2] sm:$0x1]
    %v128 = vld [vmem:[#allocation2] sm:$0x7]
    %v130 = vperm.slane %v127, 0
    %v132 = vadd.f32 %v128, %v130
    %133 = vst [vmem:[#allocation8] sm:$0x7] %v132
    %v134 = vld [vmem:[#allocation2 + $0x4] sm:$0x7]
    %v135 = vadd.f32 %v134, %v130
    %136 = vst [vmem:[#allocation8 + $0x3] sm:$0x7] %v135
    // Predicated region
    $region22: #{tpu_custom_call.1} parent=1 // pred_check
      _
    $region23: #{tpu_custom_call.1} parent=1 // pred_check_branch
      %138 = sbr.rel (0) target = $region25
    $region24: #{tpu_custom_call.1} parent=1 // pred_region
      %140 = vsyncadd [#allocation5], 0
      %s142 = sshll.u32 [#allocation8], 4
      %s143 = int_to_ptr.vmem [resolvable:$true] %s142
      %s144 = sshll.u32 %s3, 4
      %s145 = int_to_ptr.hbm [resolvable:$true] %s144
      %147 = dma.vmem_to_hbm [thread:$0]  %s143, 128, %s145, [#allocation5]
    $region25: #{tpu_custom_call.1} parent=1 // pred_fallthru
      _
    // Predicated region
    $region26: #{tpu_custom_call.1} parent=1 // pred_check
      _
    $region27: #{tpu_custom_call.1} parent=1 // pred_check_branch
      %149 = sbr.rel (0) target = $region29
    $region28: #{tpu_custom_call.1} parent=1 // pred_region
      %151 = dma.done [#allocation5], 128
    $region29: #{tpu_custom_call.1} parent=1 // pred_fallthru
      _
    %152 = vsyncpa [#allocation4], 1
    %153 = vsyncpa [#allocation7], 1
    %154 = vsyncpa [#allocation5], 1

</llo_original>
